<compile_context>
chip_gen: v7x
topology: tpu7x:2x2x1
jax: 0.10.0
libtpu: 0.0.40
codegen_flags: <defaults>
</compile_context>

<pallas_src>
import math

import jax
import jax.numpy as jnp
from jax.experimental import pallas as pl
from jax.experimental.pallas import tpu as pltpu

_LANE = 512            # lane-dense last dim (multiple of 128 -> unmasked vst)
_MAX_BLOCK_ROWS = 512  # 512 x 512 f32 = 1 MiB per tile buffer
_Z_SWITCH = 10.0       # branch switch point
_MAX_SERIES = 30       # hard cap on power-series terms
_SERIES_TOL = 5e-9     # stop the power series once the next coefficient is below this
_MAX_ASYM = 10         # asymptotic-series terms before trimming
_ASYM_TOL = 1e-8       # trim asymptotic tail whose contribution at Z_SWITCH is below this


def _make_ive_kernel(v):
    """Builds an elementwise Pallas kernel computing ive(v, z) for fixed scalar v."""
    v = float(v)
    v_is_int = abs(v - round(v)) < 1e-12
    if v_is_int and v < 0.0:
        # I_{-n}(z) == I_n(z) for integer order; fold into |v| so the series /
        # lgamma machinery below never divides by zero.
        v = -v
    v_is_zero = abs(v) < 1e-12
    v_is_odd_int = v_is_int and (int(round(v)) % 2 != 0)
    # TODO(synk): non-integer v < -1 loses the sign of Gamma(v+1) (math.lgamma returns
    # log|Gamma|); such orders are outside this module's vMF (v = d/2 - 1 >= 0) use-case.

    # log-Gamma(v+1) folded into the exp argument of the prefactor (no f32 underflow).
    lgam_v1 = math.lgamma(v + 1.0)

    # --- small-|z| power-series coefficients, pre-scaled by T^k with T = Z_SWITCH^2/4
    #     so that Horner runs in u = (|z|/Z_SWITCH)^2 in [0,1) and no d_k underflows f32.
    #     Truncation error <= first omitted d_k (u <= 1, series value >= 1), so we stop
    #     adaptively once the coefficients drop below _SERIES_TOL.
    T = _Z_SWITCH * _Z_SWITCH * 0.25
    series_coeffs = [1.0]
    c = 1.0
    for k in range(1, _MAX_SERIES):
        c *= T / (k * (v + k))
        series_coeffs.append(c)
        if c < _SERIES_TOL:
            break
    while len(series_coeffs) < 2:   # Horner seed needs two coefficients
        series_coeffs.append(0.0)

    # --- asymptotic coefficients a_k(v) = prod_{j=1..k}(4v^2 - (2j-1)^2) / k!
    mu = 4.0 * v * v
    asym_coeffs = [1.0]
    num = 1.0
    for k in range(1, _MAX_ASYM):
        num *= (mu - (2 * k - 1) ** 2)
        asym_coeffs.append(num / math.factorial(k))
    # Trim trailing terms whose worst-case contribution (at |z| = Z_SWITCH) is below
    # f32 eps — half-integer orders terminate exactly (a_k == 0), integer orders drop
    # the tiny tail.  Trimming only a trailing run keeps the truncation-error bound.
    x_max = 1.0 / (8.0 * _Z_SWITCH)
    while (len(asym_coeffs) > 2
           and abs(asym_coeffs[-1]) * x_max ** (len(asym_coeffs) - 1) < _ASYM_TOL):
        asym_coeffs.pop()

    inv_zswitch = 1.0 / _Z_SWITCH
    two_pi = 2.0 * math.pi

    def kernel(z_ref, o_ref):
        z = z_ref[...].astype(jnp.float32)
        az = jnp.abs(z)

        # ---------- small-|z| power series (Horner, scaled variable) ----------
        s = az * jnp.float32(inv_zswitch)
        u = s * s
        poly_s = jnp.float32(series_coeffs[-1]) * u + jnp.float32(series_coeffs[-2])
        for ck in reversed(series_coeffs[:-2]):
            poly_s = poly_s * u + jnp.float32(ck)

        if v_is_zero:
            small = poly_s * jnp.exp(-az)
        else:
            # exp(v*log(|z|/2) - |z| - lgamma(v+1)); 0^v -> 0 for v > 0.
            # log/exp run on the EUP (slack slot) so this is cheaper on the critical
            # (VALU) path than an integer-power ladder.
            log_half_z = jnp.log(jnp.maximum(az * jnp.float32(0.5), jnp.float32(1e-30)))
            pref = jnp.exp(jnp.float32(v) * log_half_z - az - jnp.float32(lgam_v1))
            if v > 0.0:
                pref = jnp.where(az == 0.0, jnp.float32(0.0), pref)
            small = poly_s * pref

        # ---------- large-|z| asymptotic expansion (Horner in x = -1/(8|z|)) ----------
        safe = jnp.maximum(az, jnp.float32(1.0))  # dead lanes for small |z|
        x = jnp.float32(-0.125) * pl.reciprocal(safe, approx=True)  # stays on EUP
        poly_a = jnp.float32(asym_coeffs[-1]) * x + jnp.float32(asym_coeffs[-2])
        for ck in reversed(asym_coeffs[:-2]):
            poly_a = poly_a * x + jnp.float32(ck)
        large = poly_a * jax.lax.rsqrt(jnp.float32(two_pi) * safe)

        res = jnp.where(az < jnp.float32(_Z_SWITCH), small, large)

        # negative-argument handling: parity for integer v, NaN otherwise (like scipy).
        # Skipped entirely for even integer v (incl. v=0) where the factor is +1.
        if not v_is_int:
            res = jnp.where(z < 0.0, jnp.float32(float("nan")), res)
        elif v_is_odd_int:
            res = jnp.where(z < 0.0, -res, res)

        o_ref[...] = res.astype(o_ref.dtype)

    return kernel


def _cdiv(a, b):
    return -(-a // b)


def ive(v, z):
    """Pallas TPU implementation of Ive(v).forward(z): ive(v, z) elementwise, same shape/dtype."""
    orig_shape = z.shape
    orig_dtype = z.dtype
    assert jnp.issubdtype(orig_dtype, jnp.floating), "z must be a floating point tensor"
    flat = z.reshape(-1)
    n = int(flat.shape[0])
    if n == 0:
        return z

    # sublane multiple for the block shape: 8 for f32, 16 for bf16/f16, ...
    sublane = max(8, 32 // jnp.dtype(orig_dtype).itemsize)

    rows = _cdiv(n, _LANE)
    # Aim for >= 2 grid blocks (feeds both v7x TensorCores) with tiles <= 1 MiB.
    half = _cdiv(rows, 2)
    block_rows = min(_MAX_BLOCK_ROWS, _cdiv(half, sublane) * sublane)
    padded_rows = _cdiv(rows, block_rows) * block_rows
    padded = padded_rows * _LANE

    if padded != n:  # skip pad pass when already aligned
        flat = jnp.pad(flat, (0, padded - n))
    x2d = flat.reshape(padded_rows, _LANE)

    kernel = _make_ive_kernel(v)
    out2d = pl.pallas_call(
        kernel,
        out_shape=jax.ShapeDtypeStruct((padded_rows, _LANE), orig_dtype),
        grid_spec=pltpu.PrefetchScalarGridSpec(
            num_scalar_prefetch=0,
            grid=(padded_rows // block_rows,),
            in_specs=[pl.BlockSpec((block_rows, _LANE), lambda i: (i, 0))],
            out_specs=pl.BlockSpec((block_rows, _LANE), lambda i: (i, 0)),
        ),
        compiler_params=pltpu.CompilerParams(dimension_semantics=("parallel",)),
    )(x2d)

    out_flat = out2d.reshape(-1)
    if padded != n:  # skip slice pass when already aligned
        out_flat = out_flat[:n]
    return out_flat.reshape(orig_shape)


class Ive:
    """Mirror of the PyTorch nn.Module: holds the scalar order v."""
    # TODO(synk): backward (d/dz ive = ive(v-1,z) - ive(v,z)*(v+z)/z) is not implemented here.

    def __init__(self, v):
        self.v = v

    def __call__(self, z):
        return ive(self.v, z)


if __name__ == "__main__":
    from jax.scipy import special as jsp_special

    key = jax.random.PRNGKey(0)
    # z plays the role of a concentration (kappa) tensor, shape (B, C, H, W) = (2, 4, 16, 16)
    z = jax.random.uniform(key, (2, 4, 16, 16), dtype=jnp.float32, minval=0.1, maxval=30.0)

    # typical vMF order v = d/2 - 1 (here d = 7 -> v = 2.5); also exercise v = 0 and v = 1 paths
    refs = {0.0: jsp_special.i0e, 1.0: jsp_special.i1e}
    for v in (0.0, 1.0, 2.5):
        mod = Ive(v)
        out = mod(z)
        out = jax.block_until_ready(out)
        assert out.shape == z.shape and out.dtype == z.dtype
        assert bool(jnp.all(jnp.isfinite(out)))
        assert bool(jnp.all(out > 0.0))  # ive(v, z) > 0 for z > 0
        if v in refs:  # numerical check against the closed-form scaled Bessel references
            ref = refs[v](z)
            rel = jnp.max(jnp.abs(out - ref) / jnp.maximum(jnp.abs(ref), 1e-30))
            assert bool(rel < 2e-3), f"v={v}: rel err {float(rel)}"

    print("KERNEL_OK")
</pallas_src>

<mosaic_0001>
module attributes {stable_mosaic.version = 11 : i64} {
  func.func @kernel(%arg0: i32, %arg1: memref<8x512xf32, #tpu.memory_space<vmem>>, %arg2: memref<8x512xf32, #tpu.memory_space<vmem>>) attributes {dimension_semantics = [#tpu.dimension_semantics<parallel>], iteration_bounds = array<i64: 1>, scalar_prefetch = 0 : i64, scratch_operands = 0 : i64, tpu.core_type = #tpu.core_type<tc>, window_params = [{transform_indices = @transform_0, window_bounds = array<i64: 8, 512>}, {transform_indices = @transform_1, window_bounds = array<i64: 8, 512>}]} {
    %c0 = arith.constant 0 : index
    %c0_0 = arith.constant 0 : index
    %0 = vector.load %arg1[%c0, %c0_0] : memref<8x512xf32, #tpu.memory_space<vmem>>, vector<8x512xf32>
    %1 = math.absf %0 : vector<8x512xf32>
    %cst = arith.constant 1.000000e-01 : f32
    %2 = vector.broadcast %cst : f32 to vector<8x512xf32>
    %3 = arith.mulf %1, %2 : vector<8x512xf32>
    %4 = arith.mulf %3, %3 : vector<8x512xf32>
    %cst_1 = arith.constant 1.53656499E-9 : f32
    %5 = vector.broadcast %cst_1 : f32 to vector<8x512xf32>
    %6 = arith.mulf %5, %4 : vector<8x512xf32>
    %cst_2 = arith.constant 2.45850398E-8 : f32
    %7 = vector.broadcast %cst_2 : f32 to vector<8x512xf32>
    %8 = arith.addf %6, %7 : vector<8x512xf32>
    %9 = arith.mulf %8, %4 : vector<8x512xf32>
    %cst_3 = arith.constant 3.55007984E-7 : f32
    %10 = vector.broadcast %cst_3 : f32 to vector<8x512xf32>
    %11 = arith.addf %9, %10 : vector<8x512xf32>
    %12 = arith.mulf %11, %4 : vector<8x512xf32>
    %cst_4 = arith.constant 4.60090359E-6 : f32
    %13 = vector.broadcast %cst_4 : f32 to vector<8x512xf32>
    %14 = arith.addf %12, %13 : vector<8x512xf32>
    %15 = arith.mulf %14, %4 : vector<8x512xf32>
    %cst_5 = arith.constant 5.31864425E-5 : f32
    %16 = vector.broadcast %cst_5 : f32 to vector<8x512xf32>
    %17 = arith.addf %15, %16 : vector<8x512xf32>
    %18 = arith.mulf %17, %4 : vector<8x512xf32>
    %cst_6 = arith.constant 5.44629176E-4 : f32
    %19 = vector.broadcast %cst_6 : f32 to vector<8x512xf32>
    %20 = arith.addf %18, %19 : vector<8x512xf32>
    %21 = arith.mulf %20, %4 : vector<8x512xf32>
    %cst_7 = arith.constant 0.00490166247 : f32
    %22 = vector.broadcast %cst_7 : f32 to vector<8x512xf32>
    %23 = arith.addf %21, %22 : vector<8x512xf32>
    %24 = arith.mulf %23, %4 : vector<8x512xf32>
    %cst_8 = arith.constant 0.0384290367 : f32
    %25 = vector.broadcast %cst_8 : f32 to vector<8x512xf32>
    %26 = arith.addf %24, %25 : vector<8x512xf32>
    %27 = arith.mulf %26, %4 : vector<8x512xf32>
    %cst_9 = arith.constant 0.259780288 : f32
    %28 = vector.broadcast %cst_9 : f32 to vector<8x512xf32>
    %29 = arith.addf %27, %28 : vector<8x512xf32>
    %30 = arith.mulf %29, %4 : vector<8x512xf32>
    %cst_10 = arith.constant 1.49633443 : f32
    %31 = vector.broadcast %cst_10 : f32 to vector<8x512xf32>
    %32 = arith.addf %30, %31 : vector<8x512xf32>
    %33 = arith.mulf %32, %4 : vector<8x512xf32>
    %cst_11 = arith.constant 7.24225855 : f32
    %34 = vector.broadcast %cst_11 : f32 to vector<8x512xf32>
    %35 = arith.addf %33, %34 : vector<8x512xf32>
    %36 = arith.mulf %35, %4 : vector<8x512xf32>
    %cst_12 = arith.constant 28.9690342 : f32
    %37 = vector.broadcast %cst_12 : f32 to vector<8x512xf32>
    %38 = arith.addf %36, %37 : vector<8x512xf32>
    %39 = arith.mulf %38, %4 : vector<8x512xf32>
    %cst_13 = arith.constant 93.8596725 : f32
    %40 = vector.broadcast %cst_13 : f32 to vector<8x512xf32>
    %41 = arith.addf %39, %40 : vector<8x512xf32>
    %42 = arith.mulf %41, %4 : vector<8x512xf32>
    %cst_14 = arith.constant 240.280762 : f32
    %43 = vector.broadcast %cst_14 : f32 to vector<8x512xf32>
    %44 = arith.addf %42, %43 : vector<8x512xf32>
    %45 = arith.mulf %44, %4 : vector<8x512xf32>
    %cst_15 = arith.constant 470.950287 : f32
    %46 = vector.broadcast %cst_15 : f32 to vector<8x512xf32>
    %47 = arith.addf %45, %46 : vector<8x512xf32>
    %48 = arith.mulf %47, %4 : vector<8x512xf32>
    %cst_16 = arith.constant 678.168396 : f32
    %49 = vector.broadcast %cst_16 : f32 to vector<8x512xf32>
    %50 = arith.addf %48, %49 : vector<8x512xf32>
    %51 = arith.mulf %50, %4 : vector<8x512xf32>
    %cst_17 = arith.constant 678.168396 : f32
    %52 = vector.broadcast %cst_17 : f32 to vector<8x512xf32>
    %53 = arith.addf %51, %52 : vector<8x512xf32>
    %54 = arith.mulf %53, %4 : vector<8x512xf32>
    %cst_18 = arith.constant 434.027771 : f32
    %55 = vector.broadcast %cst_18 : f32 to vector<8x512xf32>
    %56 = arith.addf %54, %55 : vector<8x512xf32>
    %57 = arith.mulf %56, %4 : vector<8x512xf32>
    %cst_19 = arith.constant 1.562500e+02 : f32
    %58 = vector.broadcast %cst_19 : f32 to vector<8x512xf32>
    %59 = arith.addf %57, %58 : vector<8x512xf32>
    %60 = arith.mulf %59, %4 : vector<8x512xf32>
    %cst_20 = arith.constant 2.500000e+01 : f32
    %61 = vector.broadcast %cst_20 : f32 to vector<8x512xf32>
    %62 = arith.addf %60, %61 : vector<8x512xf32>
    %63 = arith.mulf %62, %4 : vector<8x512xf32>
    %cst_21 = arith.constant 1.000000e+00 : f32
    %64 = vector.broadcast %cst_21 : f32 to vector<8x512xf32>
    %65 = arith.addf %63, %64 : vector<8x512xf32>
    %cst_22 = arith.constant 0.000000e+00 : f32
    %66 = vector.broadcast %cst_22 : f32 to vector<8x512xf32>
    %67 = arith.subf %66, %1 : vector<8x512xf32>
    %68 = math.exp %67 : vector<8x512xf32>
    %69 = arith.mulf %65, %68 : vector<8x512xf32>
    %cst_23 = arith.constant 1.000000e+00 : f32
    %70 = vector.broadcast %cst_23 : f32 to vector<8x512xf32>
    %71 = arith.maximumf %1, %70 : vector<8x512xf32>
    %72 = tpu.reciprocal %71 {approx = true} : vector<8x512xf32> -> vector<8x512xf32>
    %cst_24 = arith.constant -1.250000e-01 : f32
    %73 = vector.broadcast %cst_24 : f32 to vector<8x512xf32>
    %74 = arith.mulf %73, %72 : vector<8x512xf32>
    %cst_25 = arith.constant -3.27229926E+9 : f32
    %75 = vector.broadcast %cst_25 : f32 to vector<8x512xf32>
    %76 = arith.mulf %75, %74 : vector<8x512xf32>
    %cst_26 = arith.constant 0x4CC25E8D : f32
    %77 = vector.broadcast %cst_26 : f32 to vector<8x512xf32>
    %78 = arith.addf %76, %77 : vector<8x512xf32>
    %79 = arith.mulf %78, %74 : vector<8x512xf32>
    %cst_27 = arith.constant -3623307.25 : f32
    %80 = vector.broadcast %cst_27 : f32 to vector<8x512xf32>
    %81 = arith.addf %79, %80 : vector<8x512xf32>
    %82 = arith.mulf %81, %74 : vector<8x512xf32>
    %cst_28 = arith.constant 150077.813 : f32
    %83 = vector.broadcast %cst_28 : f32 to vector<8x512xf32>
    %84 = arith.addf %82, %83 : vector<8x512xf32>
    %85 = arith.mulf %84, %74 : vector<8x512xf32>
    %cst_29 = arith.constant -7441.875 : f32
    %86 = vector.broadcast %cst_29 : f32 to vector<8x512xf32>
    %87 = arith.addf %85, %86 : vector<8x512xf32>
    %88 = arith.mulf %87, %74 : vector<8x512xf32>
    %cst_30 = arith.constant 4.593750e+02 : f32
    %89 = vector.broadcast %cst_30 : f32 to vector<8x512xf32>
    %90 = arith.addf %88, %89 : vector<8x512xf32>
    %91 = arith.mulf %90, %74 : vector<8x512xf32>
    %cst_31 = arith.constant -3.750000e+01 : f32
    %92 = vector.broadcast %cst_31 : f32 to vector<8x512xf32>
    %93 = arith.addf %91, %92 : vector<8x512xf32>
    %94 = arith.mulf %93, %74 : vector<8x512xf32>
    %cst_32 = arith.constant 4.500000e+00 : f32
    %95 = vector.broadcast %cst_32 : f32 to vector<8x512xf32>
    %96 = arith.addf %94, %95 : vector<8x512xf32>
    %97 = arith.mulf %96, %74 : vector<8x512xf32>
    %cst_33 = arith.constant -1.000000e+00 : f32
    %98 = vector.broadcast %cst_33 : f32 to vector<8x512xf32>
    %99 = arith.addf %97, %98 : vector<8x512xf32>
    %100 = arith.mulf %99, %74 : vector<8x512xf32>
    %cst_34 = arith.constant 1.000000e+00 : f32
    %101 = vector.broadcast %cst_34 : f32 to vector<8x512xf32>
    %102 = arith.addf %100, %101 : vector<8x512xf32>
    %cst_35 = arith.constant 6.28318548 : f32
    %103 = vector.broadcast %cst_35 : f32 to vector<8x512xf32>
    %104 = arith.mulf %103, %71 : vector<8x512xf32>
    %105 = math.rsqrt %104 : vector<8x512xf32>
    %106 = arith.mulf %102, %105 : vector<8x512xf32>
    %cst_36 = arith.constant 1.000000e+01 : f32
    %107 = vector.broadcast %cst_36 : f32 to vector<8x512xf32>
    %108 = arith.cmpf olt, %1, %107 : vector<8x512xf32>
    %109 = arith.select %108, %69, %106 : vector<8x512xi1>, vector<8x512xf32>
    %c0_37 = arith.constant 0 : index
    %c0_38 = arith.constant 0 : index
    %110 = vector.load %arg2[%c0_37, %c0_38] : memref<8x512xf32, #tpu.memory_space<vmem>>, vector<8x512xf32>
    tpu.vector_store %arg2[%c0_37, %c0_38], %109 {strides = array<i32>} : memref<8x512xf32, #tpu.memory_space<vmem>>, vector<8x512xf32>,
    return
  }
  func.func @transform_0(%arg0: i32) -> (i32, i32) {
    %c0_i32 = arith.constant 0 : i32
    %c0_i32_0 = arith.constant 0 : i32
    return %arg0, %c0_i32 : i32, i32
  }
  func.func @transform_1(%arg0: i32) -> (i32, i32) {
    %c0_i32 = arith.constant 0 : i32
    %c0_i32_0 = arith.constant 0 : i32
    return %arg0, %c0_i32 : i32, i32
  }
}

</mosaic_0001>

<llo_original>
// kernel: tpu_custom_call.1
$region0: #{tpu_custom_call.1}
  #allocation0 [shape = 'u32[]', space=smem, size = 0x4, offset = 0x4, fixed_abs, tag = 'smem constant byte address 0x4 - core index']
  #allocation1 [shape = 'u32[144,128]{1,0:T(1,128)}', space=vmem, size = 0x12000, scoped, tag = 'internal scratch']
  %s0 = inlined_call_operand.hbm [shape: f32[8,512], index: 0, kind: input, shape index: {}]
  %s1 = inlined_call_operand.hbm [shape: f32[8,512], index: 1, kind: output, shape index: {}]
  %s2 = sld [smem:[#allocation0]]
  $region18: #{tpu_custom_call.1} parent=0
    _
  %s4 = ssub.s32 1, %s2
  %s5 = scalar_select 0, %s4, %s2
  $region1: #{tpu_custom_call.1} parent=0
    #allocation2 [shape = 'u8[16384]{0}', space=vmem, size = 0x4000, scoped, tag = 'input window, operand 0, single buffered']
    #allocation3 [shape = 's32[1]{0}', space=sflag, size = 0x4, scoped, tag = 'scoped memory for tpu_custom_call.1']
    #allocation4 [shape = 's32[1]{0}', space=sflag, size = 0x4, scoped, tag = 'scoped memory for tpu_custom_call.1']
    #allocation5 [shape = 'u8[16384]{0}', space=vmem, size = 0x4000, scoped, tag = 'output window, operand 0, single buffered']
    %6 = vsyncpa [#allocation3], 0
    %7 = vsyncpa [#allocation4], 0
    // Predicated region
    $region2: #{tpu_custom_call.1} parent=1 // pred_check
      _
    $region3: #{tpu_custom_call.1} parent=1 // pred_check_branch
      %9 = sbr.rel (0) target = $region5
    $region4: #{tpu_custom_call.1} parent=1 // pred_region
      %s11 = ssub.s32 512, 512
      %12 = vsyncadd [#allocation3], %s11
      %s14 = sshll.u32 [#allocation2], 4
      %s15 = int_to_ptr.vmem [resolvable:$true] %s14
      %17 = dma.hbm_to_vmem [thread:$0]  %s0, 512, %s15, [#allocation3]
    $region5: #{tpu_custom_call.1} parent=1 // pred_fallthru
      _
    // Predicated region
    $region6: #{tpu_custom_call.1} parent=1 // pred_check
      _
    $region7: #{tpu_custom_call.1} parent=1 // pred_check_branch
      %19 = sbr.rel (0) target = $region9
    $region8: #{tpu_custom_call.1} parent=1 // pred_region
      %20 = dma.done [#allocation3], 512
    $region9: #{tpu_custom_call.1} parent=1 // pred_fallthru
      _
    %v21 = vld [vmem:[#allocation2] sm:$0xff]
    %v22 = vld [vmem:[#allocation2 + $0x8] sm:$0xff]
    %v23 = vld [vmem:[#allocation2 + $0x10] sm:$0xff]
    %v24 = vld [vmem:[#allocation2 + $0x18] sm:$0xff]
    %v25 = vand.u32 2147483647, %v21
    %v26 = vand.u32 2147483647, %v22
    %v27 = vand.u32 2147483647, %v23
    %v28 = vand.u32 2147483647, %v24
    %v29 = vmul.f32 %v25, 0.1
    %v30 = vmul.f32 %v26, 0.1
    %v31 = vmul.f32 %v27, 0.1
    %v32 = vmul.f32 %v28, 0.1
    %v33 = vmul.f32 %v29, %v29
    %v34 = vmul.f32 %v30, %v30
    %v35 = vmul.f32 %v31, %v31
    %v36 = vmul.f32 %v32, %v32
    %v37 = vmul.f32 %v33, 1.536565e-09
    %v38 = vmul.f32 %v34, 1.536565e-09
    %v39 = vmul.f32 %v35, 1.536565e-09
    %v40 = vmul.f32 %v36, 1.536565e-09
    %v41 = vadd.f32 %v37, 2.458504e-08
    %v42 = vadd.f32 %v38, 2.458504e-08
    %v43 = vadd.f32 %v39, 2.458504e-08
    %v44 = vadd.f32 %v40, 2.458504e-08
    %v45 = vmul.f32 %v41, %v33
    %v46 = vmul.f32 %v42, %v34
    %v47 = vmul.f32 %v43, %v35
    %v48 = vmul.f32 %v44, %v36
    %v49 = vadd.f32 %v45, 3.5500798e-07
    %v50 = vadd.f32 %v46, 3.5500798e-07
    %v51 = vadd.f32 %v47, 3.5500798e-07
    %v52 = vadd.f32 %v48, 3.5500798e-07
    %v53 = vmul.f32 %v49, %v33
    %v54 = vmul.f32 %v50, %v34
    %v55 = vmul.f32 %v51, %v35
    %v56 = vmul.f32 %v52, %v36
    %v57 = vadd.f32 %v53, 4.6009036e-06
    %v58 = vadd.f32 %v54, 4.6009036e-06
    %v59 = vadd.f32 %v55, 4.6009036e-06
    %v60 = vadd.f32 %v56, 4.6009036e-06
    %v61 = vmul.f32 %v57, %v33
    %v62 = vmul.f32 %v58, %v34
    %v63 = vmul.f32 %v59, %v35
    %v64 = vmul.f32 %v60, %v36
    %v65 = vadd.f32 %v61, 5.3186443e-05
    %v66 = vadd.f32 %v62, 5.3186443e-05
    %v67 = vadd.f32 %v63, 5.3186443e-05
    %v68 = vadd.f32 %v64, 5.3186443e-05
    %v69 = vmul.f32 %v65, %v33
    %v70 = vmul.f32 %v66, %v34
    %v71 = vmul.f32 %v67, %v35
    %v72 = vmul.f32 %v68, %v36
    %v73 = vadd.f32 %v69, 0.0005446292
    %v74 = vadd.f32 %v70, 0.0005446292
    %v75 = vadd.f32 %v71, 0.0005446292
    %v76 = vadd.f32 %v72, 0.0005446292
    %v77 = vmul.f32 %v73, %v33
    %v78 = vmul.f32 %v74, %v34
    %v79 = vmul.f32 %v75, %v35
    %v80 = vmul.f32 %v76, %v36
    %v81 = vadd.f32 %v77, 0.0049016625
    %v82 = vadd.f32 %v78, 0.0049016625
    %v83 = vadd.f32 %v79, 0.0049016625
    %v84 = vadd.f32 %v80, 0.0049016625
    %v85 = vmul.f32 %v81, %v33
    %v86 = vmul.f32 %v82, %v34
    %v87 = vmul.f32 %v83, %v35
    %v88 = vmul.f32 %v84, %v36
    %v89 = vadd.f32 %v85, 0.038429037
    %v90 = vadd.f32 %v86, 0.038429037
    %v91 = vadd.f32 %v87, 0.038429037
    %v92 = vadd.f32 %v88, 0.038429037
    %v93 = vmul.f32 %v89, %v33
    %v94 = vmul.f32 %v90, %v34
    %v95 = vmul.f32 %v91, %v35
    %v96 = vmul.f32 %v92, %v36
    %v97 = vadd.f32 %v93, 0.2597803
    %v98 = vadd.f32 %v94, 0.2597803
    %v99 = vadd.f32 %v95, 0.2597803
    %v100 = vadd.f32 %v96, 0.2597803
    %v101 = vmul.f32 %v97, %v33
    %v102 = vmul.f32 %v98, %v34
    %v103 = vmul.f32 %v99, %v35
    %v104 = vmul.f32 %v100, %v36
    %v105 = vadd.f32 %v101, 1.4963344
    %v106 = vadd.f32 %v102, 1.4963344
    %v107 = vadd.f32 %v103, 1.4963344
    %v108 = vadd.f32 %v104, 1.4963344
    %v109 = vmul.f32 %v105, %v33
    %v110 = vmul.f32 %v106, %v34
    %v111 = vmul.f32 %v107, %v35
    %v112 = vmul.f32 %v108, %v36
    %v113 = vadd.f32 %v109, 7.2422585
    %v114 = vadd.f32 %v110, 7.2422585
    %v115 = vadd.f32 %v111, 7.2422585
    %v116 = vadd.f32 %v112, 7.2422585
    %v117 = vmul.f32 %v113, %v33
    %v118 = vmul.f32 %v114, %v34
    %v119 = vmul.f32 %v115, %v35
    %v120 = vmul.f32 %v116, %v36
    %v121 = vadd.f32 %v117, 28.969034
    %v122 = vadd.f32 %v118, 28.969034
    %v123 = vadd.f32 %v119, 28.969034
    %v124 = vadd.f32 %v120, 28.969034
    %v125 = vmul.f32 %v121, %v33
    %v126 = vmul.f32 %v122, %v34
    %v127 = vmul.f32 %v123, %v35
    %v128 = vmul.f32 %v124, %v36
    %v129 = vadd.f32 %v125, 93.85967
    %v130 = vadd.f32 %v126, 93.85967
    %v131 = vadd.f32 %v127, 93.85967
    %v132 = vadd.f32 %v128, 93.85967
    %v133 = vmul.f32 %v129, %v33
    %v134 = vmul.f32 %v130, %v34
    %v135 = vmul.f32 %v131, %v35
    %v136 = vmul.f32 %v132, %v36
    %v137 = vadd.f32 %v133, 240.28076
    %v138 = vadd.f32 %v134, 240.28076
    %v139 = vadd.f32 %v135, 240.28076
    %v140 = vadd.f32 %v136, 240.28076
    %v141 = vmul.f32 %v137, %v33
    %v142 = vmul.f32 %v138, %v34
    %v143 = vmul.f32 %v139, %v35
    %v144 = vmul.f32 %v140, %v36
    %v145 = vadd.f32 %v141, 470.9503
    %v146 = vadd.f32 %v142, 470.9503
    %v147 = vadd.f32 %v143, 470.9503
    %v148 = vadd.f32 %v144, 470.9503
    %v149 = vmul.f32 %v145, %v33
    %v150 = vmul.f32 %v146, %v34
    %v151 = vmul.f32 %v147, %v35
    %v152 = vmul.f32 %v148, %v36
    %v153 = vadd.f32 %v149, 678.1684
    %v154 = vadd.f32 %v150, 678.1684
    %v155 = vadd.f32 %v151, 678.1684
    %v156 = vadd.f32 %v152, 678.1684
    %v157 = vmul.f32 %v153, %v33
    %v158 = vmul.f32 %v154, %v34
    %v159 = vmul.f32 %v155, %v35
    %v160 = vmul.f32 %v156, %v36
    %v161 = vadd.f32 %v157, 678.1684
    %v162 = vadd.f32 %v158, 678.1684
    %v163 = vadd.f32 %v159, 678.1684
    %v164 = vadd.f32 %v160, 678.1684
    %v165 = vmul.f32 %v161, %v33
    %v166 = vmul.f32 %v162, %v34
    %v167 = vmul.f32 %v163, %v35
    %v168 = vmul.f32 %v164, %v36
    %v169 = vadd.f32 %v165, 434.02777
    %v170 = vadd.f32 %v166, 434.02777
    %v171 = vadd.f32 %v167, 434.02777
    %v172 = vadd.f32 %v168, 434.02777
    %v173 = vmul.f32 %v169, %v33
    %v174 = vmul.f32 %v170, %v34
    %v175 = vmul.f32 %v171, %v35
    %v176 = vmul.f32 %v172, %v36
    %v177 = vadd.f32 %v173, 156.25
    %v178 = vadd.f32 %v174, 156.25
    %v179 = vadd.f32 %v175, 156.25
    %v180 = vadd.f32 %v176, 156.25
    %v181 = vmul.f32 %v177, %v33
    %v182 = vmul.f32 %v178, %v34
    %v183 = vmul.f32 %v179, %v35
    %v184 = vmul.f32 %v180, %v36
    %v185 = vadd.f32 %v181, 25.0
    %v186 = vadd.f32 %v182, 25.0
    %v187 = vadd.f32 %v183, 25.0
    %v188 = vadd.f32 %v184, 25.0
    %v189 = vmul.f32 %v185, %v33
    %v190 = vmul.f32 %v186, %v34
    %v191 = vmul.f32 %v187, %v35
    %v192 = vmul.f32 %v188, %v36
    %v193 = vadd.f32 %v189, 1.0
    %v194 = vadd.f32 %v190, 1.0
    %v195 = vadd.f32 %v191, 1.0
    %v196 = vadd.f32 %v192, 1.0
    %v197 = vsub.f32 0.0, %v25
    %v198 = vsub.f32 0.0, %v26
    %v199 = vsub.f32 0.0, %v27
    %v200 = vsub.f32 0.0, %v28
    %v201 = vmul.f32 %v197, 1.442695
    %v202 = vpow.pop %v201
    %v203 = vmul.f32 %v198, 1.442695
    %v204 = vpow.pop %v203
    %v205 = vmul.f32 %v199, 1.442695
    %v206 = vpow.pop %v205
    %v207 = vmul.f32 %v200, 1.442695
    %v208 = vpow.pop %v207
    %v209 = vmul.f32 %v193, %v202
    %v210 = vmul.f32 %v194, %v204
    %v211 = vmul.f32 %v195, %v206
    %v212 = vmul.f32 %v196, %v208
    %v213 = vmax.f32 %v25, 1.0
    %v214 = vmax.f32 %v26, 1.0
    %v215 = vmax.f32 %v27, 1.0
    %v216 = vmax.f32 %v28, 1.0
    %v217 = vrcp.pop %v213
    %v218 = vrcp.pop %v214
    %v219 = vrcp.pop %v215
    %v220 = vrcp.pop %v216
    %v221 = vmul.f32 %v217, -0.125
    %v222 = vmul.f32 %v218, -0.125
    %v223 = vmul.f32 %v219, -0.125
    %v224 = vmul.f32 %v220, -0.125
    %v225 = vmul.f32 %v221, -3.2722993e+09
    %v226 = vmul.f32 %v222, -3.2722993e+09
    %v227 = vmul.f32 %v223, -3.2722993e+09
    %v228 = vmul.f32 %v224, -3.2722993e+09
    %v229 = vadd.f32 %v225, 1.0190551e+08
    %v230 = vadd.f32 %v226, 1.0190551e+08
    %v231 = vadd.f32 %v227, 1.0190551e+08
    %v232 = vadd.f32 %v228, 1.0190551e+08
    %v233 = vmul.f32 %v229, %v221
    %v234 = vmul.f32 %v230, %v222
    %v235 = vmul.f32 %v231, %v223
    %v236 = vmul.f32 %v232, %v224
    %v237 = vadd.f32 %v233, -3623307.3
    %v238 = vadd.f32 %v234, -3623307.3
    %v239 = vadd.f32 %v235, -3623307.3
    %v240 = vadd.f32 %v236, -3623307.3
    %v241 = vmul.f32 %v237, %v221
    %v242 = vmul.f32 %v238, %v222
    %v243 = vmul.f32 %v239, %v223
    %v244 = vmul.f32 %v240, %v224
    %v245 = vadd.f32 %v241, 150077.81
    %v246 = vadd.f32 %v242, 150077.81
    %v247 = vadd.f32 %v243, 150077.81
    %v248 = vadd.f32 %v244, 150077.81
    %v249 = vmul.f32 %v245, %v221
    %v250 = vmul.f32 %v246, %v222
    %v251 = vmul.f32 %v247, %v223
    %v252 = vmul.f32 %v248, %v224
    %v253 = vadd.f32 %v249, -7441.875
    %v254 = vadd.f32 %v250, -7441.875
    %v255 = vadd.f32 %v251, -7441.875
    %v256 = vadd.f32 %v252, -7441.875
    %v257 = vmul.f32 %v253, %v221
    %v258 = vmul.f32 %v254, %v222
    %v259 = vmul.f32 %v255, %v223
    %v260 = vmul.f32 %v256, %v224
    %v261 = vadd.f32 %v257, 459.375
    %v262 = vadd.f32 %v258, 459.375
    %v263 = vadd.f32 %v259, 459.375
    %v264 = vadd.f32 %v260, 459.375
    %v265 = vmul.f32 %v261, %v221
    %v266 = vmul.f32 %v262, %v222
    %v267 = vmul.f32 %v263, %v223
    %v268 = vmul.f32 %v264, %v224
    %v269 = vadd.f32 %v265, -37.5
    %v270 = vadd.f32 %v266, -37.5
    %v271 = vadd.f32 %v267, -37.5
    %v272 = vadd.f32 %v268, -37.5
    %v273 = vmul.f32 %v269, %v221
    %v274 = vmul.f32 %v270, %v222
    %v275 = vmul.f32 %v271, %v223
    %v276 = vmul.f32 %v272, %v224
    %v277 = vadd.f32 %v273, 4.5
    %v278 = vadd.f32 %v274, 4.5
    %v279 = vadd.f32 %v275, 4.5
    %v280 = vadd.f32 %v276, 4.5
    %v281 = vmul.f32 %v277, %v221
    %v282 = vmul.f32 %v278, %v222
    %v283 = vmul.f32 %v279, %v223
    %v284 = vmul.f32 %v280, %v224
    %v285 = vadd.f32 %v281, -1.0
    %v286 = vadd.f32 %v282, -1.0
    %v287 = vadd.f32 %v283, -1.0
    %v288 = vadd.f32 %v284, -1.0
    %v289 = vmul.f32 %v285, %v221
    %v290 = vmul.f32 %v286, %v222
    %v291 = vmul.f32 %v287, %v223
    %v292 = vmul.f32 %v288, %v224
    %v293 = vadd.f32 %v289, 1.0
    %v294 = vadd.f32 %v290, 1.0
    %v295 = vadd.f32 %v291, 1.0
    %v296 = vadd.f32 %v292, 1.0
    %v297 = vmul.f32 %v213, 6.2831855
    %v298 = vmul.f32 %v214, 6.2831855
    %v299 = vmul.f32 %v215, 6.2831855
    %v300 = vmul.f32 %v216, 6.2831855
    %v301 = vrsqrt.pop %v297
    %v302 = vrsqrt.pop %v298
    %v303 = vrsqrt.pop %v299
    %v304 = vrsqrt.pop %v300
    %v305 = vmul.f32 %v293, %v301
    %v306 = vmul.f32 %v294, %v302
    %v307 = vmul.f32 %v295, %v303
    %v308 = vmul.f32 %v296, %v304
    %vm309 = vcmp.lt.f32.partialorder %v25, 10.0
    %vm310 = vcmp.lt.f32.partialorder %v26, 10.0
    %vm311 = vcmp.lt.f32.partialorder %v27, 10.0
    %vm312 = vcmp.lt.f32.partialorder %v28, 10.0
    %v313 = vsel %vm309, %v209, %v305
    %v314 = vsel %vm310, %v210, %v306
    %v315 = vsel %vm311, %v211, %v307
    %v316 = vsel %vm312, %v212, %v308
    %317 = vst [vmem:[#allocation5] sm:$0xff] %v313
    %318 = vst [vmem:[#allocation5 + $0x8] sm:$0xff] %v314
    %319 = vst [vmem:[#allocation5 + $0x10] sm:$0xff] %v315
    %320 = vst [vmem:[#allocation5 + $0x18] sm:$0xff] %v316
    // Predicated region
    $region10: #{tpu_custom_call.1} parent=1 // pred_check
      _
    $region11: #{tpu_custom_call.1} parent=1 // pred_check_branch
      %322 = sbr.rel (0) target = $region13
    $region12: #{tpu_custom_call.1} parent=1 // pred_region
      %s324 = ssub.s32 512, 512
      %325 = vsyncadd [#allocation4], %s324
      %s327 = sshll.u32 [#allocation5], 4
      %s328 = int_to_ptr.vmem [resolvable:$true] %s327
      %330 = dma.vmem_to_hbm [thread:$0]  %s328, 512, %s1, [#allocation4]
    $region13: #{tpu_custom_call.1} parent=1 // pred_fallthru
      _
    // Predicated region
    $region14: #{tpu_custom_call.1} parent=1 // pred_check
      _
    $region15: #{tpu_custom_call.1} parent=1 // pred_check_branch
      %332 = sbr.rel (0) target = $region17
    $region16: #{tpu_custom_call.1} parent=1 // pred_region
      %333 = dma.done [#allocation4], 512
    $region17: #{tpu_custom_call.1} parent=1 // pred_fallthru
      _
    %334 = vsyncpa [#allocation3], 1
    %335 = vsyncpa [#allocation4], 1

</llo_original>
